<compile_context>
chip_gen: v5e
topology: v5e:2x2
jax: 0.10.0
libtpu: 0.0.40
codegen_flags: <defaults>
</compile_context>

<pallas_src>
import jax
import jax.numpy as jnp
from jax import lax
from jax.experimental import pallas as pl
from jax.experimental.pallas import tpu as pltpu


EMBED_DIM = 300
NUM_SKILL_FEATS = 8   # fc_skill input size in the reference module


def _vmem_spec():
    return pl.BlockSpec(memory_space=pltpu.MemorySpace.VMEM)


def _sigmoid(x):
    # numerically stable logistic via EUP tanh (avoids exp overflow)
    return 0.5 * (jnp.tanh(0.5 * x) + 1.0)


# ---------------------------------------------------------------------------
# Input projection: gates_x = x @ W (+ b) as ONE wide MXU matmul (hoisted out of
# the sequential recurrence).  bf16 operands, f32 accumulation.
# ---------------------------------------------------------------------------
def _proj_kernel(x_ref, w_ref, b_ref, o_ref):
    o_ref[...] = (jnp.dot(x_ref[...], w_ref[...],
                          preferred_element_type=jnp.float32) + b_ref[...])


def _proj2_kernel(xa_ref, wa_ref, xb_ref, wb_ref, b_ref, o_ref):
    # Used for layers > 0: consumes the previous layer's fwd/bwd sequences
    # separately so no host-side concat is needed.
    o_ref[...] = (jnp.dot(xa_ref[...], wa_ref[...], preferred_element_type=jnp.float32)
                  + jnp.dot(xb_ref[...], wb_ref[...], preferred_element_type=jnp.float32)
                  + b_ref[...])


def _row_block(m):
    for rb in (512, 256, 128, 64, 32, 16, 8):
        if m % rb == 0:
            return rb
    return m


def input_projection(x2d, w, b):
    m, d = x2d.shape
    g = w.shape[1]
    rb = _row_block(m)
    return pl.pallas_call(
        _proj_kernel,
        out_shape=jax.ShapeDtypeStruct((m, g), jnp.float32),
        grid=(m // rb,),
        in_specs=[pl.BlockSpec((rb, d), lambda i: (i, 0)),
                  pl.BlockSpec((d, g), lambda i: (0, 0)),
                  pl.BlockSpec((1, g), lambda i: (0, 0))],
        out_specs=pl.BlockSpec((rb, g), lambda i: (i, 0)),
        compiler_params=pltpu.CompilerParams(dimension_semantics=("parallel",)),
    )(x2d, w, b)


def input_projection2(xa, wa, xb, wb, b):
    m, da = xa.shape
    db = xb.shape[1]
    g = wa.shape[1]
    rb = _row_block(m)
    return pl.pallas_call(
        _proj2_kernel,
        out_shape=jax.ShapeDtypeStruct((m, g), jnp.float32),
        grid=(m // rb,),
        in_specs=[pl.BlockSpec((rb, da), lambda i: (i, 0)),
                  pl.BlockSpec((da, g), lambda i: (0, 0)),
                  pl.BlockSpec((rb, db), lambda i: (i, 0)),
                  pl.BlockSpec((db, g), lambda i: (0, 0)),
                  pl.BlockSpec((1, g), lambda i: (0, 0))],
        out_specs=pl.BlockSpec((rb, g), lambda i: (i, 0)),
        compiler_params=pltpu.CompilerParams(dimension_semantics=("parallel",)),
    )(xa, wa, xb, wb, b)


# ---------------------------------------------------------------------------
# Weight packing (plain-JAX glue, done once per layer).
# Gate column layout of the fused 8H axis: [i_f|i_b | f_f|f_b | g_f|g_b | o_f|o_b],
# each block H wide, consistent with state layout [h_f | h_b] per gate.
# ---------------------------------------------------------------------------
def _pack_ih(w_f, w_b, H):
    D = w_f.shape[0]
    wf = w_f.reshape(D, 4, H)
    wb = w_b.reshape(D, 4, H)
    return jnp.concatenate([wf, wb], axis=-1).reshape(D, 8 * H)


def _pack_bias(b_f, b_b, H):
    bf = b_f.reshape(1, 4, H)
    bb = b_b.reshape(1, 4, H)
    return jnp.concatenate([bf, bb], axis=-1).reshape(1, 8 * H)


def _pack_hh(w_f, w_b, H):
    # Block-diagonal [2H, 8H]: rows 0:H (fwd h) feed fwd gate columns,
    # rows H:2H (bwd h) feed bwd gate columns.
    wf = w_f.reshape(H, 4, H)
    wb = w_b.reshape(H, 4, H)
    z = jnp.zeros_like(wf)
    top = jnp.concatenate([wf, z], axis=-1)   # [H, 4, 2H]
    bot = jnp.concatenate([z, wb], axis=-1)   # [H, 4, 2H]
    return jnp.concatenate([top, bot], axis=0).reshape(2 * H, 8 * H)


# ---------------------------------------------------------------------------
# Fused bidirectional LSTM recurrence over a T-chunked grid.
# Per grid step c: forward scans global t = c*Tc + j, backward scans the
# mirrored chunk (t = T-1 - (c*Tc + j)); h/c state persists in VMEM scratch.
# ---------------------------------------------------------------------------
def _make_bilstm_kernel(t_chunk, hidden):
    H = hidden
    G = 8 * H
    two_h = 2 * H

    def kernel(gxf_ref, gxb_ref, mf_ref, mb_ref, whh_ref,
               seqf_ref, seqb_ref, hfin_ref, h_sc, c_sc):
        c = pl.program_id(0)

        @pl.when(c == 0)
        def _init():
            h_sc[...] = jnp.zeros_like(h_sc)
            c_sc[...] = jnp.zeros_like(c_sc)

        # static lane masks, hoisted out of the step loop
        gcol = lax.broadcasted_iota(jnp.int32, (1, G), 1)
        fwd_cols = (gcol // H) % 2 == 0                      # fwd gate columns
        hcol = lax.broadcasted_iota(jnp.int32, (1, two_h), 1)
        fwd_half = (hcol < H).astype(jnp.float32)            # [1, 2H]
        bwd_half = 1.0 - fwd_half

        def step(j, carry):
            rj = t_chunk - 1 - j
            # fused per-step input gates: fwd columns from this chunk's row j,
            # bwd columns from the mirrored chunk's row rj (precomputed matmul).
            gx = jnp.where(fwd_cols, gxf_ref[j], gxb_ref[rj])            # [B, 8H]
            gh = jnp.dot(h_sc[...].astype(jnp.bfloat16), whh_ref[...],
                         preferred_element_type=jnp.float32)             # [B, 8H]
            gates = gx + gh

            i_g = _sigmoid(gates[:, 0:two_h])
            f_g = _sigmoid(gates[:, two_h:2 * two_h])
            g_g = jnp.tanh(gates[:, 2 * two_h:3 * two_h])
            o_g = _sigmoid(gates[:, 3 * two_h:4 * two_h])

            c_new = f_g * c_sc[...] + i_g * g_g
            h_new = o_g * jnp.tanh(c_new)

            # packed-sequence masking (pack_padded_sequence semantics)
            m = mf_ref[j] * fwd_half + mb_ref[rj] * bwd_half             # [B, 2H]
            keep = 1.0 - m
            c_sc[...] = m * c_new + keep * c_sc[...]
            h_sc[...] = m * h_new + keep * h_sc[...]
            h_out = m * h_new                                            # zero at pads
            seqf_ref[j] = h_out[:, 0:H]
            seqb_ref[rj] = h_out[:, H:two_h]
            return carry

        if t_chunk <= 8:
            # full unroll with static indices (LLO scheduler visibility)
            for j in range(t_chunk):
                step(j, 0)
        else:
            lax.fori_loop(0, t_chunk, step, 0)

        @pl.when(c == pl.num_programs(0) - 1)
        def _finalize():
            hfin_ref[...] = h_sc[...]    # [B, 2H] = cat(h_fwd_final, h_bwd_final)

    return kernel


def bilstm_layer(gx, vmask, whh_bd, hidden, t_chunk):
    T, B, G = gx.shape
    H = hidden
    assert T % t_chunk == 0
    nchunks = T // t_chunk
    kernel = _make_bilstm_kernel(t_chunk, H)

    fwd_idx = lambda c: (c, 0, 0)
    bwd_idx = lambda c: (nchunks - 1 - c, 0, 0)

    seq_f, seq_b, hfin = pl.pallas_call(
        kernel,
        out_shape=(jax.ShapeDtypeStruct((T, B, H), jnp.float32),
                   jax.ShapeDtypeStruct((T, B, H), jnp.float32),
                   jax.ShapeDtypeStruct((B, 2 * H), jnp.float32)),
        grid=(nchunks,),
        in_specs=[pl.BlockSpec((t_chunk, B, G), fwd_idx),     # gates (fwd view)
                  pl.BlockSpec((t_chunk, B, G), bwd_idx),     # gates (mirrored view)
                  pl.BlockSpec((t_chunk, B, 1), fwd_idx),     # validity mask (fwd)
                  pl.BlockSpec((t_chunk, B, 1), bwd_idx),     # validity mask (bwd)
                  pl.BlockSpec((2 * H, G), lambda c: (0, 0))],  # block-diag W_hh
        out_specs=(pl.BlockSpec((t_chunk, B, H), fwd_idx),
                   pl.BlockSpec((t_chunk, B, H), bwd_idx),
                   pl.BlockSpec((B, 2 * H), lambda c: (0, 0))),  # resident final h
        scratch_shapes=[pltpu.VMEM((B, 2 * H), jnp.float32),
                        pltpu.VMEM((B, 2 * H), jnp.float32)],
        compiler_params=pltpu.CompilerParams(
            dimension_semantics=("arbitrary",),
            vmem_limit_bytes=32 * 1024 * 1024),
    )(gx, gx, vmask, vmask, whh_bd)
    return seq_f, seq_b, hfin


# ---------------------------------------------------------------------------
# Head: relu(cat(h_fwd, h_bwd)) -> fc1 -> (dropout=identity), fc_skill(skills)
#       -> fc2(concat) -> sigmoid.  fc2 applied as two partial matmuls
#       (mathematically identical to concatenating then multiplying).
# ---------------------------------------------------------------------------
def _head_kernel(cat_ref, sknum_ref, w1_ref, b1_ref, wsk_ref, bsk_ref,
                 w2d_ref, w2s_ref, b2_ref, out_ref):
    rel = jnp.maximum(cat_ref[...], 0.0)
    dense1 = jnp.dot(rel, w1_ref[...], preferred_element_type=jnp.float32) + b1_ref[...]
    skills = jnp.dot(sknum_ref[...], wsk_ref[...], preferred_element_type=jnp.float32) + bsk_ref[...]
    # TODO(synk): nn.Dropout treated as identity (inference mode); stochastic
    # training-time dropout is not modeled.
    logits = (jnp.dot(dense1, w2d_ref[...], preferred_element_type=jnp.float32)
              + jnp.dot(skills, w2s_ref[...], preferred_element_type=jnp.float32)
              + b2_ref[...])
    out_ref[...] = _sigmoid(logits)


# ---------------------------------------------------------------------------
# Parameter construction (deterministic) + forward wrapper.
# ---------------------------------------------------------------------------
def init_params(key, vocab_size, hidden_dim1, hidden_dim2, n_layers,
                skills_size, skill_dim):
    def nxt():
        nonlocal key
        key, sub = jax.random.split(key)
        return sub

    def u(shape, scale=0.1):
        return jax.random.uniform(nxt(), shape, jnp.float32, -scale, scale)

    p = {
        "hidden_dim1": hidden_dim1,
        "n_layers": n_layers,
        "embedding": u((vocab_size, EMBED_DIM)),
        "number_embed": u((skills_size, 3)),
        "w1": u((hidden_dim1 * 2, hidden_dim2)),
        "b1": u((1, hidden_dim2)),
        "wsk": u((NUM_SKILL_FEATS, skill_dim)),
        "bsk": u((1, skill_dim)),
        "w2d": u((hidden_dim2, 1)),
        "w2s": u((skill_dim, 1)),
        "b2": u((1, 1)),
    }
    for l in range(n_layers):
        in_dim = EMBED_DIM if l == 0 else 2 * hidden_dim1
        for d in ("f", "b"):
            p[f"w_ih_{d}{l}"] = u((in_dim, 4 * hidden_dim1))
            p[f"w_hh_{d}{l}"] = u((hidden_dim1, 4 * hidden_dim1))
            p[f"b_{d}{l}"] = u((1, 4 * hidden_dim1))   # b_ih + b_hh folded together
    return p


def _pick_t_chunk(T, cap=128):
    tc = min(T, cap)
    while T % tc != 0:
        tc -= 1
    return tc


def bilstm_forward(params, text, text_lengths, skills, t_chunk=None):
    H = params["hidden_dim1"]
    n_layers = params["n_layers"]
    B, T = text.shape

    # plain-JAX glue: embedding gathers, layout, mask + weight packing
    emb = jnp.take(params["embedding"], text, axis=0)              # [B, T, 300]
    sk_emb = jnp.take(params["number_embed"], skills, axis=0)      # [B, 8, 3]
    skills_number = sk_emb[:, :, 0].astype(jnp.float32)            # [B, 8]

    x_tm = jnp.transpose(emb, (1, 0, 2))                           # [T, B, 300]
    lengths = text_lengths.astype(jnp.int32)
    vmask = (jnp.arange(T)[:, None, None]
             < lengths[None, :, None]).astype(jnp.float32)         # [T, B, 1]

    if t_chunk is None:
        t_chunk = _pick_t_chunk(T)

    seq_f = seq_b = hfin = None
    for l in range(n_layers):
        wih = _pack_ih(params[f"w_ih_f{l}"], params[f"w_ih_b{l}"], H).astype(jnp.bfloat16)
        bih = _pack_bias(params[f"b_f{l}"], params[f"b_b{l}"], H)
        whh = _pack_hh(params[f"w_hh_f{l}"], params[f"w_hh_b{l}"], H).astype(jnp.bfloat16)

        if l == 0:
            x2d = x_tm.reshape(T * B, EMBED_DIM).astype(jnp.bfloat16)
            gx = input_projection(x2d, wih, bih)                   # [T*B, 8H] f32
        else:
            xa = seq_f.reshape(T * B, H).astype(jnp.bfloat16)
            xb = seq_b.reshape(T * B, H).astype(jnp.bfloat16)
            gx = input_projection2(xa, wih[:H], xb, wih[H:], bih)
        gx = gx.reshape(T, B, 8 * H)

        seq_f, seq_b, hfin = bilstm_layer(gx, vmask, whh, H, t_chunk)

    # cat(hidden[-2], hidden[-1]) comes straight out of the kernel as hfin [B, 2H]
    cat = hfin

    preds = pl.pallas_call(
        _head_kernel,
        out_shape=jax.ShapeDtypeStruct((B, 1), jnp.float32),
        in_specs=[_vmem_spec()] * 9,
        out_specs=_vmem_spec(),
    )(cat, skills_number,
      params["w1"], params["b1"], params["wsk"], params["bsk"],
      params["w2d"], params["w2s"], params["b2"])
    return preds


if __name__ == "__main__":
    # small, deterministic config
    vocab_size = 50
    hidden_dim1 = 32
    hidden_dim2 = 16
    n_layers = 1
    skills_size = 10
    skill_dim = 4
    B, T = 2, 8

    key = jax.random.PRNGKey(0)
    key, k_params, k_text, k_skills = jax.random.split(key, 4)

    params = init_params(k_params, vocab_size, hidden_dim1, hidden_dim2,
                         n_layers, skills_size, skill_dim)

    text = jax.random.randint(k_text, (B, T), 0, vocab_size, dtype=jnp.int32)
    # pack_padded_sequence requires descending lengths
    text_lengths = jnp.array([T, T - 2], dtype=jnp.int32)
    skills = jax.random.randint(k_skills, (B, NUM_SKILL_FEATS), 0, skills_size,
                                dtype=jnp.int32)

    # t_chunk=4 -> 2 grid steps: exercises the pipelined chunked recurrence
    preds = bilstm_forward(params, text, text_lengths, skills, t_chunk=4)
    preds = jax.block_until_ready(preds)

    assert preds.shape == (B, 1)
    assert bool(jnp.all((preds > 0.0) & (preds < 1.0)))
    print("KERNEL_OK")
</pallas_src>

<mosaic_0001>
module attributes {stable_mosaic.version = 11 : i64} {
  func.func @_proj_kernel(%arg0: i32, %arg1: memref<16x300xbf16, #tpu.memory_space<vmem>>, %arg2: memref<300x256xbf16, #tpu.memory_space<vmem>>, %arg3: memref<1x256xf32, #tpu.memory_space<vmem>>, %arg4: memref<16x256xf32, #tpu.memory_space<vmem>>) attributes {dimension_semantics = [#tpu.dimension_semantics<parallel>], iteration_bounds = array<i64: 1>, scalar_prefetch = 0 : i64, scratch_operands = 0 : i64, tpu.core_type = #tpu.core_type<tc>, window_params = [{transform_indices = @transform_0, window_bounds = array<i64: 16, 300>}, {pipeline_mode = #tpu.pipeline_mode<synchronous>, transform_indices = @transform_1, window_bounds = array<i64: 300, 256>}, {pipeline_mode = #tpu.pipeline_mode<synchronous>, transform_indices = @transform_2, window_bounds = array<i64: 1, 256>}, {transform_indices = @transform_3, window_bounds = array<i64: 16, 256>}]} {
    %c0 = arith.constant 0 : index
    %c0_0 = arith.constant 0 : index
    %0 = vector.load %arg1[%c0, %c0_0] : memref<16x300xbf16, #tpu.memory_space<vmem>>, vector<16x300xbf16>
    %c0_1 = arith.constant 0 : index
    %c0_2 = arith.constant 0 : index
    %1 = vector.load %arg2[%c0_1, %c0_2] : memref<300x256xbf16, #tpu.memory_space<vmem>>, vector<300x256xbf16>
    %cst = arith.constant dense<0.000000e+00> : vector<16x256xf32>
    %2 = tpu.matmul %0, %1, %cst {dimension_numbers = #tpu.dot_dimension_numbers<[1], [0], [0], [1], [0, 0, 1, 1], [], []>} : vector<16x300xbf16>, vector<300x256xbf16>, vector<16x256xf32> -> vector<16x256xf32>
    %c0_3 = arith.constant 0 : index
    %c0_4 = arith.constant 0 : index
    %3 = vector.load %arg3[%c0_3, %c0_4] : memref<1x256xf32, #tpu.memory_space<vmem>>, vector<1x256xf32>
    %4 = vector.broadcast %3 : vector<1x256xf32> to vector<16x256xf32>
    %5 = arith.addf %2, %4 : vector<16x256xf32>
    %c0_5 = arith.constant 0 : index
    %c0_6 = arith.constant 0 : index
    %6 = vector.load %arg4[%c0_5, %c0_6] : memref<16x256xf32, #tpu.memory_space<vmem>>, vector<16x256xf32>
    tpu.vector_store %arg4[%c0_5, %c0_6], %5 {strides = array<i32>} : memref<16x256xf32, #tpu.memory_space<vmem>>, vector<16x256xf32>,
    return
  }
  func.func @transform_0(%arg0: i32) -> (i32, i32) {
    %c0_i32 = arith.constant 0 : i32
    %c0_i32_0 = arith.constant 0 : i32
    return %arg0, %c0_i32 : i32, i32
  }
  func.func @transform_1(%arg0: i32) -> (i32, i32) {
    %c0_i32 = arith.constant 0 : i32
    %c0_i32_0 = arith.constant 0 : i32
    %c0_i32_1 = arith.constant 0 : i32
    return %c0_i32, %c0_i32_0 : i32, i32
  }
  func.func @transform_2(%arg0: i32) -> (i32, i32) {
    %c0_i32 = arith.constant 0 : i32
    %c0_i32_0 = arith.constant 0 : i32
    %c0_i32_1 = arith.constant 0 : i32
    return %c0_i32, %c0_i32_0 : i32, i32
  }
  func.func @transform_3(%arg0: i32) -> (i32, i32) {
    %c0_i32 = arith.constant 0 : i32
    %c0_i32_0 = arith.constant 0 : i32
    return %arg0, %c0_i32 : i32, i32
  }
}

</mosaic_0001>

<llo_original>
// kernel: tpu_custom_call.1
$region0: #{tpu_custom_call.1}
  #allocation0 [shape = 'u32[]', space=smem, size = 0x4, offset = 0x4, fixed_abs, tag = 'smem constant byte address 0x4 - core index']
  #allocation1 [shape = 'u32[72,128]{1,0:T(1,128)}', space=vmem, size = 0x9000, scoped, tag = 'internal scratch']
  %s0 = inlined_call_operand.hbm [shape: bf16[16,300], index: 0, kind: input, shape index: {}]
  %s1 = inlined_call_operand.hbm [shape: bf16[300,256], index: 1, kind: input, shape index: {}]
  %s2 = inlined_call_operand.hbm [shape: f32[1,256], index: 2, kind: input, shape index: {}]
  %s3 = inlined_call_operand.hbm [shape: f32[16,256], index: 3, kind: output, shape index: {}]
  %s4 = sld [smem:[#allocation0]]
  $region34: #{tpu_custom_call.1} parent=0
    _
  %s6 = ssub.s32 1, %s4
  %s7 = scalar_select 0, %s6, %s4
  $region1: #{tpu_custom_call.1} parent=0
    #allocation2 [shape = 'u8[12288]{0}', space=vmem, size = 0x3000, scoped, tag = 'input window, operand 0, single buffered']
    #allocation3 [shape = 's32[1]{0}', space=sflag, size = 0x4, scoped, tag = 'scoped memory for tpu_custom_call.1']
    #allocation4 [shape = 's32[1]{0}', space=sflag, size = 0x4, scoped, tag = 'scoped memory for tpu_custom_call.1']
    #allocation5 [shape = 'u8[155648]{0}', space=vmem, size = 0x26000, scoped, tag = 'input window, operand 1, single buffered']
    #allocation6 [shape = 's32[1]{0}', space=sflag, size = 0x4, scoped, tag = 'scoped memory for tpu_custom_call.1']
    #allocation7 [shape = 'u8[1024]{0}', space=vmem, size = 0x400, scoped, tag = 'input window, operand 2, single buffered']
    #allocation8 [shape = 'u8[16384]{0}', space=vmem, size = 0x4000, scoped, tag = 'output window, operand 0, single buffered']
    %8 = vsyncpa [#allocation3], 0
    %9 = vsyncpa [#allocation6], 0
    %10 = vsyncpa [#allocation4], 0
    // Predicated region
    $region2: #{tpu_custom_call.1} parent=1 // pred_check
      _
    $region3: #{tpu_custom_call.1} parent=1 // pred_check_branch
      %12 = sbr.rel (0) target = $region5
    $region4: #{tpu_custom_call.1} parent=1 // pred_region
      %14 = vsyncadd [#allocation3], 0
      %s15 = sshll.u32 %s0, 4
      %s16 = int_to_ptr.hbm [resolvable:$true] %s15
      %s17 = sshll.u32 [#allocation2], 4
      %s18 = int_to_ptr.vmem [resolvable:$true] %s17
      %23 = dma.hbm_to_vmem [thread:$0]  %s16, 384, %s18, [#allocation3], 192, 192, 12
    $region5: #{tpu_custom_call.1} parent=1 // pred_fallthru
      _
    // Predicated region
    $region6: #{tpu_custom_call.1} parent=1 // pred_check
      _
    $region7: #{tpu_custom_call.1} parent=1 // pred_check_branch
      %25 = sbr.rel (0) target = $region9
    $region8: #{tpu_custom_call.1} parent=1 // pred_region
      %27 = vsyncadd [#allocation6], 0
      %s28 = sshll.u32 %s1, 4
      %s29 = int_to_ptr.hbm [resolvable:$true] %s28
      %s30 = sshll.u32 [#allocation5], 4
      %s31 = int_to_ptr.vmem [resolvable:$true] %s30
      %36 = dma.hbm_to_vmem [thread:$0]  %s29, 4864, %s31, [#allocation6], 128, 128, 8
    $region9: #{tpu_custom_call.1} parent=1 // pred_fallthru
      _
    // Predicated region
    $region10: #{tpu_custom_call.1} parent=1 // pred_check
      _
    $region11: #{tpu_custom_call.1} parent=1 // pred_check_branch
      %38 = sbr.rel (0) target = $region13
    $region12: #{tpu_custom_call.1} parent=1 // pred_region
      %40 = vsyncadd [#allocation6], 0
      %s42 = sshll.u32 %s2, 4
      %s43 = int_to_ptr.hbm [resolvable:$true] %s42
      %s44 = sshll.u32 [#allocation7], 4
      %s45 = int_to_ptr.vmem [resolvable:$true] %s44
      %47 = dma.hbm_to_vmem [thread:$0]  %s43, 32, %s45, [#allocation6]
    $region13: #{tpu_custom_call.1} parent=1 // pred_fallthru
      _
    // Predicated region
    $region14: #{tpu_custom_call.1} parent=1 // pred_check
      _
    $region15: #{tpu_custom_call.1} parent=1 // pred_check_branch
      %49 = sbr.rel (0) target = $region17
    $region16: #{tpu_custom_call.1} parent=1 // pred_region
      %51 = dma.done [#allocation3], 384
    $region17: #{tpu_custom_call.1} parent=1 // pred_fallthru
      _
    // Predicated region
    $region18: #{tpu_custom_call.1} parent=1 // pred_check
      _
    $region19: #{tpu_custom_call.1} parent=1 // pred_check_branch
      %53 = sbr.rel (0) target = $region21
    $region20: #{tpu_custom_call.1} parent=1 // pred_region
      %55 = dma.done [#allocation6], 4864
    $region21: #{tpu_custom_call.1} parent=1 // pred_fallthru
      _
    // Predicated region
    $region22: #{tpu_custom_call.1} parent=1 // pred_check
      _
    $region23: #{tpu_custom_call.1} parent=1 // pred_check_branch
      %57 = sbr.rel (0) target = $region25
    $region24: #{tpu_custom_call.1} parent=1 // pred_region
      %59 = dma.done [#allocation6], 32
    $region25: #{tpu_custom_call.1} parent=1 // pred_fallthru
      _
    %v61 = vld [vmem:[#allocation2] sm:$0xff]
    %v62 = vld [vmem:[#allocation2 + $0x8] sm:$0xf]
    %v63 = vld [vmem:[#allocation2 + $0xc] sm:$0xff]
    %v64 = vld [vmem:[#allocation2 + $0x14] sm:$0xf]
    %v65 = vld [vmem:[#allocation5] sm:$0xff]
    %v66 = vld [vmem:[#allocation5 + $0x8] sm:$0xff]
    %v67 = vld [vmem:[#allocation5 + $0x10] sm:$0xff]
    %v68 = vld [vmem:[#allocation5 + $0x18] sm:$0xff]
    %v69 = vld [vmem:[#allocation5 + $0x20] sm:$0xff]
    %v70 = vld [vmem:[#allocation5 + $0x28] sm:$0xff]
    %v71 = vld [vmem:[#allocation5 + $0x30] sm:$0xff]
    %v72 = vld [vmem:[#allocation5 + $0x38] sm:$0xff]
    %v73 = vld [vmem:[#allocation5 + $0x40] sm:$0xff]
    %v74 = vld [vmem:[#allocation5 + $0x48] sm:$0xff]
    %v75 = vld [vmem:[#allocation5 + $0x50] sm:$0xff]
    %v76 = vld [vmem:[#allocation5 + $0x58] sm:$0xff]
    %v77 = vld [vmem:[#allocation5 + $0x60] sm:$0xff]
    %v78 = vld [vmem:[#allocation5 + $0x68] sm:$0xff]
    %v79 = vld [vmem:[#allocation5 + $0x70] sm:$0xff]
    %v80 = vld [vmem:[#allocation5 + $0x78] sm:$0xff]
    %v81 = vld [vmem:[#allocation5 + $0x80] sm:$0xff]
    %v82 = vld [vmem:[#allocation5 + $0x88] sm:$0xff]
    %v83 = vld [vmem:[#allocation5 + $0x90] sm:$0xff]
    %v84 = vld [vmem:[#allocation5 + $0x98] sm:$0xff]
    %v85 = vld [vmem:[#allocation5 + $0xa0] sm:$0xff]
    %v86 = vld [vmem:[#allocation5 + $0xa8] sm:$0xff]
    %v87 = vld [vmem:[#allocation5 + $0xb0] sm:$0xff]
    %v88 = vld [vmem:[#allocation5 + $0xb8] sm:$0xff]
    %v89 = vld [vmem:[#allocation5 + $0xc0] sm:$0xff]
    %v90 = vld [vmem:[#allocation5 + $0xc8] sm:$0xff]
    %v91 = vld [vmem:[#allocation5 + $0xd0] sm:$0xff]
    %v92 = vld [vmem:[#allocation5 + $0xd8] sm:$0xff]
    %v93 = vld [vmem:[#allocation5 + $0xe0] sm:$0xff]
    %v94 = vld [vmem:[#allocation5 + $0xe8] sm:$0xff]
    %v95 = vld [vmem:[#allocation5 + $0xf0] sm:$0xff]
    %v96 = vld [vmem:[#allocation5 + $0xf8] sm:$0xff]
    %v97 = vld [vmem:[#allocation5 + $0x100] sm:$0xff]
    %v98 = vld [vmem:[#allocation5 + $0x108] sm:$0xff]
    %v99 = vld [vmem:[#allocation5 + $0x110] sm:$0xff]
    %v100 = vld [vmem:[#allocation5 + $0x118] sm:$0xff]
    %v101 = vld [vmem:[#allocation5 + $0x120] sm:$0xff]
    %v102 = vld [vmem:[#allocation5 + $0x128] sm:$0x33]
    %v103 = vld [vmem:[#allocation7] sm:$0x3]
    %v105 = vperm.slane %v103, 0
    %v106 = vperm.slane %v103, 1
    %v113 = vunpack.c.l.b16 %v61
    %v114 = vunpack.c.h.b16 %v61
    %v115 = vunpack.c.l.b16 %v62
    %v116 = vunpack.c.l.b16 %v63
    %v117 = vunpack.c.h.b16 %v63
    %v118 = vunpack.c.l.b16 %v64
    %v119 = vpack.c.b16 %v116, %v113
    %v120 = vpack.c.b16 %v117, %v114
    %v121 = vpack.c.b16 %v118, %v115
    %v162 = vunpack.c.l.b16 %v65
    %v163 = vunpack.c.h.b16 %v65
    %v164 = vunpack.c.l.b16 %v66
    %v165 = vunpack.c.h.b16 %v66
    %v166 = vunpack.c.l.b16 %v67
    %v167 = vunpack.c.h.b16 %v67
    %v168 = vunpack.c.l.b16 %v68
    %v169 = vunpack.c.h.b16 %v68
    %v170 = vunpack.c.l.b16 %v69
    %v171 = vunpack.c.h.b16 %v69
    %v172 = vunpack.c.l.b16 %v70
    %v173 = vunpack.c.h.b16 %v70
    %v174 = vunpack.c.l.b16 %v71
    %v175 = vunpack.c.h.b16 %v71
    %v176 = vunpack.c.l.b16 %v72
    %v177 = vunpack.c.h.b16 %v72
    %v178 = vunpack.c.l.b16 %v73
    %v179 = vunpack.c.h.b16 %v73
    %v180 = vunpack.c.l.b16 %v74
    %v181 = vunpack.c.h.b16 %v74
    %v182 = vunpack.c.l.b16 %v75
    %v183 = vunpack.c.h.b16 %v75
    %v184 = vunpack.c.l.b16 %v76
    %v185 = vunpack.c.h.b16 %v76
    %v186 = vunpack.c.l.b16 %v77
    %v187 = vunpack.c.h.b16 %v77
    %v188 = vunpack.c.l.b16 %v78
    %v189 = vunpack.c.h.b16 %v78
    %v190 = vunpack.c.l.b16 %v79
    %v191 = vunpack.c.h.b16 %v79
    %v192 = vunpack.c.l.b16 %v80
    %v193 = vunpack.c.h.b16 %v80
    %v194 = vunpack.c.l.b16 %v81
    %v195 = vunpack.c.h.b16 %v81
    %v196 = vunpack.c.l.b16 %v82
    %v197 = vunpack.c.h.b16 %v82
    %v198 = vunpack.c.l.b16 %v83
    %v199 = vunpack.c.h.b16 %v83
    %v200 = vunpack.c.l.b16 %v84
    %v201 = vunpack.c.h.b16 %v84
    %v202 = vunpack.c.l.b16 %v85
    %v203 = vunpack.c.h.b16 %v85
    %v204 = vunpack.c.l.b16 %v86
    %v205 = vunpack.c.h.b16 %v86
    %v206 = vunpack.c.l.b16 %v87
    %v207 = vunpack.c.h.b16 %v87
    %v208 = vunpack.c.l.b16 %v88
    %v209 = vunpack.c.h.b16 %v88
    %v210 = vunpack.c.l.b16 %v89
    %v211 = vunpack.c.h.b16 %v89
    %v212 = vunpack.c.l.b16 %v90
    %v213 = vunpack.c.h.b16 %v90
    %v214 = vunpack.c.l.b16 %v91
    %v215 = vunpack.c.h.b16 %v91
    %v216 = vunpack.c.l.b16 %v92
    %v217 = vunpack.c.h.b16 %v92
    %v218 = vunpack.c.l.b16 %v93
    %v219 = vunpack.c.h.b16 %v93
    %v220 = vunpack.c.l.b16 %v94
    %v221 = vunpack.c.h.b16 %v94
    %v222 = vunpack.c.l.b16 %v95
    %v223 = vunpack.c.h.b16 %v95
    %v224 = vunpack.c.l.b16 %v96
    %v225 = vunpack.c.h.b16 %v96
    %v226 = vunpack.c.l.b16 %v97
    %v227 = vunpack.c.h.b16 %v97
    %v228 = vunpack.c.l.b16 %v98
    %v229 = vunpack.c.h.b16 %v98
    %v230 = vunpack.c.l.b16 %v99
    %v231 = vunpack.c.h.b16 %v99
    %v232 = vunpack.c.l.b16 %v100
    %v233 = vunpack.c.h.b16 %v100
    %v234 = vunpack.c.l.b16 %v101
    %v235 = vunpack.c.h.b16 %v101
    %v236 = vunpack.c.l.b16 %v102
    %v237 = vunpack.c.h.b16 %v102
    %v238 = vpack.c.b16 %v164, %v162
    %v239 = vpack.c.b16 %v165, %v163
    %v240 = vpack.c.b16 %v168, %v166
    %v241 = vpack.c.b16 %v169, %v167
    %v242 = vpack.c.b16 %v172, %v170
    %v243 = vpack.c.b16 %v173, %v171
    %v244 = vpack.c.b16 %v176, %v174
    %v245 = vpack.c.b16 %v177, %v175
    %v246 = vpack.c.b16 %v180, %v178
    %v247 = vpack.c.b16 %v181, %v179
    %v248 = vpack.c.b16 %v184, %v182
    %v249 = vpack.c.b16 %v185, %v183
    %v250 = vpack.c.b16 %v188, %v186
    %v251 = vpack.c.b16 %v189, %v187
    %v252 = vpack.c.b16 %v192, %v190
    %v253 = vpack.c.b16 %v193, %v191
    %v254 = vpack.c.b16 %v196, %v194
    %v255 = vpack.c.b16 %v197, %v195
    %v256 = vpack.c.b16 %v200, %v198
    %v257 = vpack.c.b16 %v201, %v199
    %v258 = vpack.c.b16 %v204, %v202
    %v259 = vpack.c.b16 %v205, %v203
    %v260 = vpack.c.b16 %v208, %v206
    %v261 = vpack.c.b16 %v209, %v207
    %v262 = vpack.c.b16 %v212, %v210
    %v263 = vpack.c.b16 %v213, %v211
    %v264 = vpack.c.b16 %v216, %v214
    %v265 = vpack.c.b16 %v217, %v215
    %v266 = vpack.c.b16 %v220, %v218
    %v267 = vpack.c.b16 %v221, %v219
    %v268 = vpack.c.b16 %v224, %v222
    %v269 = vpack.c.b16 %v225, %v223
    %v270 = vpack.c.b16 %v228, %v226
    %v271 = vpack.c.b16 %v229, %v227
    %v272 = vpack.c.b16 %v232, %v230
    %v273 = vpack.c.b16 %v233, %v231
    %v274 = vpack.c.b16 %v236, %v234
    %v275 = vpack.c.b16 %v237, %v235
    %vm312 = vcmask 359424
    %v314 = vsel %vm312, %v121, 0
    %vm316 = vcmask 1045504
    %v318 = vsel %vm316, %v274, 0
    %v321 = vsel %vm316, %v275, 0
    %323 = vmatpush.bf16.msra.mxu0 %v252
    %324 = vmatpush.bf16.msra.mxu0 %v250
    %325 = vmatpush.bf16.msra.mxu0 %v248
    %326 = vmatpush.bf16.msra.mxu0 %v246
    %327 = vmatpush.bf16.msra.mxu0 %v244
    %328 = vmatpush.bf16.msra.mxu0 %v242
    %329 = vmatpush.bf16.msra.mxu0 %v240
    %330 = vmatpush.bf16.msra.mxu0 %v238
    %331 = vmatmul.bf16.gmra.mxu0 %v119
    %v332 = vpop.f32.mrf.mxu0
    %v333 = vadd.f32 %v105, %v332
    %v334 = vpop.f32.mrf.mxu0
    %v335 = vadd.f32 %v105, %v334
    %336 = vdwg.mxu0
    %337 = vmatpush.bf16.msra.mxu0 %v268
    %338 = vmatpush.bf16.msra.mxu0 %v266
    %339 = vmatpush.bf16.msra.mxu0 %v264
    %340 = vmatpush.bf16.msra.mxu0 %v262
    %341 = vmatpush.bf16.msra.mxu0 %v260
    %342 = vmatpush.bf16.msra.mxu0 %v258
    %343 = vmatpush.bf16.msra.mxu0 %v256
    %344 = vmatpush.bf16.msra.mxu0 %v254
    %345 = vmatmul.bf16.gmra.mxu0 %v120
    %v346 = vpop.f32.mrf.mxu0
    %v347 = vadd.f32 %v333, %v346
    %v348 = vpop.f32.mrf.mxu0
    %v349 = vadd.f32 %v335, %v348
    %350 = vdwg.mxu0
    %351 = vmatpush.bf16.msra.mxu0 0
    %352 = vmatpush.bf16.msra.mxu0 0
    %353 = vmatpush.bf16.msra.mxu0 0
    %354 = vmatpush.bf16.msra.mxu0 0
    %355 = vmatpush.bf16.msra.mxu0 0
    %356 = vmatpush.bf16.msra.mxu0 %v318
    %357 = vmatpush.bf16.msra.mxu0 %v272
    %358 = vmatpush.bf16.msra.mxu0 %v270
    %359 = vmatmul.bf16.gmra.mxu0 %v314
    %v360 = vpop.f32.mrf.mxu0
    %v361 = vadd.f32 %v347, %v360
    %v362 = vpop.f32.mrf.mxu0
    %v363 = vadd.f32 %v349, %v362
    %364 = vdwg.mxu0
    %365 = vmatpush.bf16.msra.mxu0 %v253
    %366 = vmatpush.bf16.msra.mxu0 %v251
    %367 = vmatpush.bf16.msra.mxu0 %v249
    %368 = vmatpush.bf16.msra.mxu0 %v247
    %369 = vmatpush.bf16.msra.mxu0 %v245
    %370 = vmatpush.bf16.msra.mxu0 %v243
    %371 = vmatpush.bf16.msra.mxu0 %v241
    %372 = vmatpush.bf16.msra.mxu0 %v239
    %373 = vmatmul.bf16.gmra.mxu0 %v119
    %v374 = vpop.f32.mrf.mxu0
    %v375 = vadd.f32 %v106, %v374
    %v376 = vpop.f32.mrf.mxu0
    %v377 = vadd.f32 %v106, %v376
    %378 = vdwg.mxu0
    %379 = vmatpush.bf16.msra.mxu0 %v269
    %380 = vmatpush.bf16.msra.mxu0 %v267
    %381 = vmatpush.bf16.msra.mxu0 %v265
    %382 = vmatpush.bf16.msra.mxu0 %v263
    %383 = vmatpush.bf16.msra.mxu0 %v261
    %384 = vmatpush.bf16.msra.mxu0 %v259
    %385 = vmatpush.bf16.msra.mxu0 %v257
    %386 = vmatpush.bf16.msra.mxu0 %v255
    %387 = vmatmul.bf16.gmra.mxu0 %v120
    %v388 = vpop.f32.mrf.mxu0
    %v389 = vadd.f32 %v375, %v388
    %v390 = vpop.f32.mrf.mxu0
    %v391 = vadd.f32 %v377, %v390
    %392 = vdwg.mxu0
    %393 = vmatpush.bf16.msra.mxu0 0
    %394 = vmatpush.bf16.msra.mxu0 0
    %395 = vmatpush.bf16.msra.mxu0 0
    %396 = vmatpush.bf16.msra.mxu0 0
    %397 = vmatpush.bf16.msra.mxu0 0
    %398 = vmatpush.bf16.msra.mxu0 %v321
    %399 = vmatpush.bf16.msra.mxu0 %v273
    %400 = vmatpush.bf16.msra.mxu0 %v271
    %401 = vmatmul.bf16.gmra.mxu0 %v314
    %v402 = vpop.f32.mrf.mxu0
    %v403 = vadd.f32 %v389, %v402
    %v404 = vpop.f32.mrf.mxu0
    %v405 = vadd.f32 %v391, %v404
    %406 = vdwg.mxu0
    %407 = vst [vmem:[#allocation8] sm:$0xff] %v361
    %408 = vst [vmem:[#allocation8 + $0x8] sm:$0xff] %v403
    %409 = vst [vmem:[#allocation8 + $0x10] sm:$0xff] %v363
    %410 = vst [vmem:[#allocation8 + $0x18] sm:$0xff] %v405
    // Predicated region
    $region26: #{tpu_custom_call.1} parent=1 // pred_check
      _
    $region27: #{tpu_custom_call.1} parent=1 // pred_check_branch
      %412 = sbr.rel (0) target = $region29
    $region28: #{tpu_custom_call.1} parent=1 // pred_region
      %414 = vsyncadd [#allocation4], 0
      %s415 = sshll.u32 [#allocation8], 4
      %s416 = int_to_ptr.vmem [resolvable:$true] %s415
      %s417 = sshll.u32 %s3, 4
      %s418 = int_to_ptr.hbm [resolvable:$true] %s417
      %423 = dma.vmem_to_hbm [thread:$0]  %s416, 512, %s418, [#allocation4], 256, 256, 16
    $region29: #{tpu_custom_call.1} parent=1 // pred_fallthru
      _
    // Predicated region
    $region30: #{tpu_custom_call.1} parent=1 // pred_check
      _
    $region31: #{tpu_custom_call.1} parent=1 // pred_check_branch
      %425 = sbr.rel (0) target = $region33
    $region32: #{tpu_custom_call.1} parent=1 // pred_region
      %427 = dma.done [#allocation4], 512
    $region33: #{tpu_custom_call.1} parent=1 // pred_fallthru
      _
    %428 = vsyncpa [#allocation3], 1
    %429 = vsyncpa [#allocation6], 1
    %430 = vsyncpa [#allocation4], 1

</llo_original>
